<compile_context>
chip_gen: v5e
topology: v5e:2x2
jax: 0.10.0
libtpu: 0.0.40
codegen_flags: <defaults>
</compile_context>

<pallas_src>
import functools

import numpy as np
import jax
import jax.numpy as jnp
from jax.experimental import pallas as pl
from jax.experimental.pallas import tpu as pltpu

F32 = jnp.float32
EPS = 1e-5
LANE = 128


def _round_up(x, m):
    return ((x + m - 1) // m) * m


def _lanes(hw):
    return max(LANE, _round_up(hw, LANE))


# -----------------------------------------------------------------------------
# shape-dependent constants (numpy, cached once per shape)
# -----------------------------------------------------------------------------
def _interp_matrix_np(out_size, in_size):
    """Bilinear interpolation matrix (out_size, in_size), align_corners=True."""
    A = np.zeros((out_size, in_size), np.float32)
    if out_size == 1:
        src = np.zeros((1,), np.float64)
    else:
        src = np.arange(out_size, dtype=np.float64) * (in_size - 1) / (out_size - 1)
    i0 = np.clip(np.floor(src).astype(np.int64), 0, in_size - 1)
    i1 = np.minimum(i0 + 1, in_size - 1)
    frac = (src - i0).astype(np.float32)
    rows = np.arange(out_size)
    np.add.at(A, (rows, i0), 1.0 - frac)
    np.add.at(A, (rows, i1), frac)
    return A


@functools.lru_cache(maxsize=None)
def _tap_table(H, W):
    """Shifts + per-tap validity masks for a 3x3 / pad=1 stencil on the flat H*W axis."""
    HW, HWp = H * W, _lanes(H * W)
    h = np.arange(HW) // W
    w = np.arange(HW) % W
    shifts, masks = [], np.zeros((9, 1, HWp), np.float32)
    t = 0
    for ky in (-1, 0, 1):
        for kx in (-1, 0, 1):
            shifts.append(ky * W + kx)
            ok = (h + ky >= 0) & (h + ky < H) & (w + kx >= 0) & (w + kx < W)
            masks[t, 0, :HW] = ok.astype(np.float32)
            t += 1
    return tuple(shifts), jnp.asarray(masks)


@functools.lru_cache(maxsize=None)
def _identity_table(H, W):
    """Single-tap table for 1x1 convs: the tap mask doubles as the valid-lane mask."""
    HW, HWp = H * W, _lanes(H * W)
    m = np.zeros((1, 1, HWp), np.float32)
    m[0, 0, :HW] = 1.0
    return (0,), jnp.asarray(m)


@functools.lru_cache(maxsize=None)
def _upsample_matrix(Hi, Wi):
    """K with x_flat @ K = bilinear x2 upsample (align_corners=True); zero on pad lanes."""
    Ho, Wo = 2 * Hi, 2 * Wi
    Ah, Aw = _interp_matrix_np(Ho, Hi), _interp_matrix_np(Wo, Wi)
    HWi, HWo = Hi * Wi, Ho * Wo
    K = np.zeros((_lanes(HWi), _lanes(HWo)), np.float32)
    full = np.einsum('ab,cd->acbd', Ah, Aw).reshape(HWo, HWi)   # [q, p]
    K[:HWi, :HWo] = full.T
    return jnp.asarray(K)


@functools.lru_cache(maxsize=None)
def _pool_select_matrix(Hi, Wi):
    """0/1 matrix picking input position (2*ho, 2*wo) for pooled output (ho, wo)."""
    Ho, Wo = Hi // 2, Wi // 2
    S = np.zeros((_lanes(Hi * Wi), _lanes(Ho * Wo)), np.float32)
    for ho in range(Ho):
        for wo in range(Wo):
            S[(2 * ho) * Wi + 2 * wo, ho * Wo + wo] = 1.0
    return jnp.asarray(S)


# -----------------------------------------------------------------------------
# Pallas kernels
# -----------------------------------------------------------------------------
def _conv_bn_body(x_ref, w_ref, m_ref, N, C_in, C_out, HW, HWp, shifts):
    """Shared conv (len(shifts) taps) + train-mode BatchNorm (gamma=1, beta=0) body.

    Returns per-image normalized (C_out, HWp) slabs plus the valid-lane mask.
    """
    ys = []
    s1 = jnp.zeros((C_out, 1), F32)
    s2 = jnp.zeros((C_out, 1), F32)
    for n in range(N):
        xn = x_ref[n * C_in:(n + 1) * C_in, :]
        acc = jnp.zeros((C_out, HWp), F32)
        for t, s in enumerate(shifts):
            xt = xn if s == 0 else pltpu.roll(xn, (-s) % HWp, 1)
            acc = acc + jnp.dot(w_ref[t], xt * m_ref[t], preferred_element_type=F32)
        ys.append(acc)
        s1 = s1 + jnp.sum(acc, axis=1, keepdims=True)
        s2 = s2 + jnp.sum(acc * acc, axis=1, keepdims=True)
    cnt = jnp.float32(N * HW)
    mean = s1 / cnt
    var = jnp.maximum(s2 / cnt - mean * mean, 0.0)       # one-pass stats
    rstd = jax.lax.rsqrt(var + jnp.float32(EPS))
    valid = m_ref[shifts.index(0)]                       # 1 on real lanes, 0 on pads
    return [(y - mean) * rstd * valid for y in ys], valid


@functools.lru_cache(maxsize=None)
def _build_conv_bn(N, C_in, C_out, H, W, ksize):
    HW, HWp = H * W, _lanes(H * W)
    shifts = _tap_table(H, W)[0] if ksize == 3 else _identity_table(H, W)[0]
    T = len(shifts)

    def kernel(x_ref, w_ref, m_ref, o_ref):
        ys, _ = _conv_bn_body(x_ref, w_ref, m_ref, N, C_in, C_out, HW, HWp, shifts)
        for n in range(N):
            o_ref[n * C_out:(n + 1) * C_out, :] = ys[n]

    return pl.pallas_call(
        kernel,
        out_shape=jax.ShapeDtypeStruct((N * C_out, HWp), F32),
        grid=(1,),
        in_specs=[
            pl.BlockSpec((N * C_in, HWp), lambda i: (0, 0)),
            pl.BlockSpec((T, C_out, C_in), lambda i: (0, 0, 0)),
            pl.BlockSpec((T, 1, HWp), lambda i: (0, 0, 0)),
        ],
        out_specs=pl.BlockSpec((N * C_out, HWp), lambda i: (0, 0)),
        compiler_params=pltpu.CompilerParams(dimension_semantics=("arbitrary",)),
    )


@functools.lru_cache(maxsize=None)
def _build_head(N, C, H, W):
    """Output head: BasicConv2d(C,C,3,pad=1)+BN then Conv2d(C,1,1)+bias, fused."""
    HW, HWp = H * W, _lanes(H * W)
    shifts = _tap_table(H, W)[0]

    def kernel(x_ref, w3_ref, m_ref, w1_ref, b_ref, o_ref):
        ys, valid = _conv_bn_body(x_ref, w3_ref, m_ref, N, C, C, HW, HWp, shifts)
        bias = b_ref[0]
        for n in range(N):
            head = jnp.dot(w1_ref[...], ys[n], preferred_element_type=F32) + bias
            o_ref[n:n + 1, :] = head * valid

    return pl.pallas_call(
        kernel,
        out_shape=jax.ShapeDtypeStruct((N, HWp), F32),
        grid=(1,),
        in_specs=[
            pl.BlockSpec((N * C, HWp), lambda i: (0, 0)),
            pl.BlockSpec((9, C, C), lambda i: (0, 0, 0)),
            pl.BlockSpec((9, 1, HWp), lambda i: (0, 0, 0)),
            pl.BlockSpec((1, C), lambda i: (0, 0)),
            pl.BlockSpec((1,), lambda i: (0,), memory_space=pltpu.MemorySpace.SMEM),
        ],
        out_specs=pl.BlockSpec((N, HWp), lambda i: (0, 0)),
        compiler_params=pltpu.CompilerParams(dimension_semantics=("arbitrary",)),
    )


@functools.lru_cache(maxsize=None)
def _build_maxpool(NC, Hi, Wi):
    """MaxPool2d(kernel=3, stride=2, padding=1) on the flat lane-dense layout."""
    HWi_p = _lanes(Hi * Wi)
    HWo_p = _lanes((Hi // 2) * (Wi // 2))
    shifts = _tap_table(Hi, Wi)[0]
    NEG = 1e30

    def kernel(x_ref, m_ref, s_ref, o_ref):
        x = x_ref[...]
        best = None
        for t, s in enumerate(shifts):
            xt = x if s == 0 else pltpu.roll(x, (-s) % HWi_p, 1)
            mt = m_ref[t]
            xt = xt * mt + (mt - 1.0) * NEG       # invalid / pad taps -> -1e30
            best = xt if best is None else jnp.maximum(best, xt)
        # stride-2 spatial subsampling as a 0/1 selection matmul (keeps lanes dense)
        o_ref[...] = jnp.dot(best, s_ref[...], preferred_element_type=F32)

    return pl.pallas_call(
        kernel,
        out_shape=jax.ShapeDtypeStruct((NC, HWo_p), F32),
        grid=(1,),
        in_specs=[
            pl.BlockSpec((NC, HWi_p), lambda i: (0, 0)),
            pl.BlockSpec((9, 1, HWi_p), lambda i: (0, 0, 0)),
            pl.BlockSpec((HWi_p, HWo_p), lambda i: (0, 0)),
        ],
        out_specs=pl.BlockSpec((NC, HWo_p), lambda i: (0, 0)),
        compiler_params=pltpu.CompilerParams(dimension_semantics=("arbitrary",)),
    )


@functools.lru_cache(maxsize=None)
def _build_upsample(NC, Hi, Wi):
    """Bilinear x2 upsample (align_corners=True): one spatial matmul."""
    HWi_p = _lanes(Hi * Wi)
    HWo_p = _lanes(4 * Hi * Wi)

    def kernel(x_ref, k_ref, o_ref):
        o_ref[...] = jnp.dot(x_ref[...], k_ref[...], preferred_element_type=F32)

    return pl.pallas_call(
        kernel,
        out_shape=jax.ShapeDtypeStruct((NC, HWo_p), F32),
        grid=(1,),
        in_specs=[
            pl.BlockSpec((NC, HWi_p), lambda i: (0, 0)),
            pl.BlockSpec((HWi_p, HWo_p), lambda i: (0, 0)),
        ],
        out_specs=pl.BlockSpec((NC, HWo_p), lambda i: (0, 0)),
        compiler_params=pltpu.CompilerParams(dimension_semantics=("arbitrary",)),
    )


@functools.lru_cache(maxsize=None)
def _build_fusion(N, C, H, W):
    """Fused Attention (avgpool -> 1x1 conv + bias -> sigmoid) + s*e + s*att + s."""
    HW, HWp = H * W, _lanes(H * W)

    def kernel(s_ref, e_ref, d_ref, wa_ref, ba_ref, o_ref):
        inv = jnp.float32(1.0 / HW)
        for n in range(N):
            lo, hi = n * C, (n + 1) * C
            pooled = jnp.sum(d_ref[lo:hi, :], axis=1, keepdims=True) * inv    # (C, 1)
            att = jax.nn.sigmoid(
                jnp.dot(wa_ref[...], pooled, preferred_element_type=F32) + ba_ref[...])
            o_ref[lo:hi, :] = s_ref[lo:hi, :] * (e_ref[lo:hi, :] + att + 1.0)

    return pl.pallas_call(
        kernel,
        out_shape=jax.ShapeDtypeStruct((N * C, HWp), F32),
        grid=(1,),
        in_specs=[
            pl.BlockSpec((N * C, HWp), lambda i: (0, 0)),
            pl.BlockSpec((N * C, HWp), lambda i: (0, 0)),
            pl.BlockSpec((N * C, HWp), lambda i: (0, 0)),
            pl.BlockSpec((C, C), lambda i: (0, 0)),
            pl.BlockSpec((C, 1), lambda i: (0, 0)),
        ],
        out_specs=pl.BlockSpec((N * C, HWp), lambda i: (0, 0)),
        compiler_params=pltpu.CompilerParams(dimension_semantics=("arbitrary",)),
    )


# -----------------------------------------------------------------------------
# thin op wrappers on the canonical (N*C, round_up(H*W, 128)) layout
# -----------------------------------------------------------------------------
def conv_bn_op(x, w, N, H, W):
    """BasicConv2d: k x k conv (no bias, pad=(k-1)//2) + train-mode BatchNorm."""
    C_out, C_in, k, _ = w.shape
    if k == 3:
        _, masks = _tap_table(H, W)
        wt = jnp.transpose(w, (2, 3, 0, 1)).reshape(9, C_out, C_in)
    else:
        _, masks = _identity_table(H, W)
        wt = w.reshape(1, C_out, C_in)
    return _build_conv_bn(N, C_in, C_out, H, W, k)(x, wt, masks)


def maxpool_op(x, N, C, Hi, Wi):
    _, masks = _tap_table(Hi, Wi)
    return _build_maxpool(N * C, Hi, Wi)(x, masks, _pool_select_matrix(Hi, Wi))


def upsample_op(x, N, C, Hi, Wi):
    return _build_upsample(N * C, Hi, Wi)(x, _upsample_matrix(Hi, Wi))


def fusion_op(s, e, d, wa, ba, N, C, H, W):
    return _build_fusion(N, C, H, W)(s, e, d, wa, ba.reshape(C, 1))


def head_op(x, w3, w1, b1, N, C, H, W):
    _, masks = _tap_table(H, W)
    w3t = jnp.transpose(w3, (2, 3, 0, 1)).reshape(9, C, C)
    return _build_head(N, C, H, W)(x, w3t, masks, w1, b1)


def to_canon(x):
    """(N, C, H, W) -> lane-dense (N*C, round_up(H*W, 128)) f32."""
    N, C, H, W = x.shape
    HW, HWp = H * W, _lanes(H * W)
    flat = x.astype(F32).reshape(N * C, HW)
    if HWp > HW:
        flat = jnp.pad(flat, ((0, 0), (0, HWp - HW)))
    return flat


def cat_canon(parts, N, chans):
    """Per-image channel concat in the canonical layout (matches torch.cat(dim=1))."""
    stacked = [p.reshape(N, c, p.shape[-1]) for p, c in zip(parts, chans)]
    return jnp.concatenate(stacked, axis=1).reshape(N * sum(chans), -1)


# -----------------------------------------------------------------------------
# MultiFusionOutput.forward (Pallas path)
# -----------------------------------------------------------------------------
def multi_fusion_forward(P, feats):
    N, C, H1, W1 = feats['s1'].shape
    dims = {1: (H1, W1), 2: (H1 // 2, W1 // 2), 3: (H1 // 4, W1 // 4), 4: (H1 // 8, W1 // 8)}

    s = {k: to_canon(feats[f's{k}']) for k in (1, 2, 3, 4)}
    d = {k: to_canon(feats[f'd{k}']) for k in (1, 2, 3, 4)}
    e = {k: to_canon(feats[f'e{k}']) for k in (1, 2, 3, 4)}

    def CBN(x, name, lvl):
        return conv_bn_op(x, P[name], N, *dims[lvl])

    def POOL(x, lvl):                        # level lvl -> lvl + 1
        return maxpool_op(x, N, C, *dims[lvl])

    def UP(x, lvl):                          # level lvl -> lvl - 1
        return upsample_op(x, N, C, *dims[lvl])

    def CATCONV(x, name, lvl):
        return CBN(CBN(x, name + '_0', lvl), name + '_1', lvl)

    def FUSE(ss, ee, dd, name, lvl):
        return fusion_op(ss, ee, dd, P[name + '_w'], P[name + '_b'], N, C, *dims[lvl])

    def HEAD(x, name):
        return head_op(x, P[name + '_conv3'], P[name + '_conv1'], P[name + '_bias'],
                       N, C, *dims[1])

    # ---- level 4 ----
    d4 = cat_canon([d[4], CBN(POOL(d[3], 3), 'conv_downsampled4', 4)], N, [C, C])
    d4 = CATCONV(d4, 'conv_catd4', 4)
    e4 = cat_canon([e[4], CBN(POOL(e[3], 3), 'conv_downsamplee4', 4)], N, [C, C])
    e4 = CATCONV(e4, 'conv_cate4', 4)
    s4 = cat_canon([s[4], CBN(POOL(s[3], 3), 'conv_downsamples4', 4)], N, [C, C])
    s4 = CATCONV(s4, 'conv_cats4', 4)
    s4 = FUSE(s4, e4, d4, 'att_4', 4)

    # ---- level 3 ----
    d3 = cat_canon([d[3], CBN(UP(d4, 4), 'conv_upsampled3', 3),
                    CBN(POOL(d[2], 2), 'conv_downsampled3', 3)], N, [C, C, C])
    d3 = CATCONV(d3, 'conv_catd3', 3)
    e3 = cat_canon([e[3], CBN(UP(e4, 4), 'conv_upsamplee3', 3),
                    CBN(POOL(e[2], 2), 'conv_downsamplee3', 3)], N, [C, C, C])
    e3 = CATCONV(e3, 'conv_cate3', 3)
    s3 = cat_canon([s[3], CBN(UP(s4, 4), 'conv_upsamples3', 3),
                    CBN(POOL(s[2], 2), 'conv_downsamples3', 3)], N, [C, C, C])
    s3 = CATCONV(s3, 'conv_cats3', 3)
    s3 = FUSE(s3, e3, d3, 'att_3', 3)

    # ---- level 2 ----
    d2 = cat_canon([d[2], CBN(UP(d3, 3), 'conv_upsampled2', 2),
                    CBN(POOL(d[1], 1), 'conv_downsampled2', 2)], N, [C, C, C])
    d2 = CATCONV(d2, 'conv_catd2', 2)
    e2 = cat_canon([e[2], CBN(UP(e3, 3), 'conv_upsamplee2', 2),
                    CBN(POOL(e[1], 1), 'conv_downsamplee2', 2)], N, [C, C, C])
    e2 = CATCONV(e2, 'conv_cate2', 2)
    s2 = cat_canon([s[2], CBN(UP(s3, 3), 'conv_upsamples2', 2),
                    CBN(POOL(s[1], 1), 'conv_downsamples2', 2)], N, [C, C, C])
    s2 = CATCONV(s2, 'conv_cats2', 2)
    s2 = FUSE(s2, e2, d2, 'att_2', 2)

    # ---- level 1 ----
    d1 = cat_canon([d[1], CBN(UP(d2, 2), 'conv_upsampled1', 1)], N, [C, C])
    d1 = CATCONV(d1, 'conv_catd1', 1)
    e1 = cat_canon([e[1], CBN(UP(e2, 2), 'conv_upsamplee1', 1)], N, [C, C])
    e1 = CATCONV(e1, 'conv_cate1', 1)
    s1 = cat_canon([s[1], CBN(UP(s2, 2), 'conv_upsamples1', 1)], N, [C, C])
    s1 = CATCONV(s1, 'conv_cats1', 1)
    s1 = FUSE(s1, e1, d1, 'att_1', 1)

    s_map = HEAD(s1, 'outputs')[:, :H1 * W1].reshape(N, 1, H1, W1)
    e_map = HEAD(e1, 'outpute')[:, :H1 * W1].reshape(N, 1, H1, W1)
    return s_map, e_map


# -----------------------------------------------------------------------------
# pure-JAX reference (NCHW)
# -----------------------------------------------------------------------------
def _ref_conv_bn(x, w):
    k = w.shape[-1]
    p = (k - 1) // 2
    y = jax.lax.conv_general_dilated(x, w, (1, 1), [(p, p), (p, p)],
                                     dimension_numbers=('NCHW', 'OIHW', 'NCHW'))
    mean = y.mean(axis=(0, 2, 3), keepdims=True)
    var = ((y - mean) ** 2).mean(axis=(0, 2, 3), keepdims=True)
    return (y - mean) * jax.lax.rsqrt(var + EPS)


def _ref_pool(x):
    return jax.lax.reduce_window(x, -jnp.inf, jax.lax.max,
                                 (1, 1, 3, 3), (1, 1, 2, 2),
                                 ((0, 0), (0, 0), (1, 1), (1, 1)))


def _ref_up(x):
    _, _, H, W = x.shape
    Ah = jnp.asarray(_interp_matrix_np(2 * H, H))
    Aw = jnp.asarray(_interp_matrix_np(2 * W, W))
    return jnp.einsum('ah,bw,nchw->ncab', Ah, Aw, x)


def _ref_att(x, w, b):
    pooled = x.mean(axis=(2, 3), keepdims=True)
    z = jnp.einsum('oc,nchw->nohw', w, pooled) + b[None, :, None, None]
    return jax.nn.sigmoid(z)


def multi_fusion_forward_ref(P, feats):
    s1, s2, s3, s4 = (feats[f's{k}'] for k in (1, 2, 3, 4))
    d1, d2, d3, d4 = (feats[f'd{k}'] for k in (1, 2, 3, 4))
    e1, e2, e3, e4 = (feats[f'e{k}'] for k in (1, 2, 3, 4))
    cbn, up, pool, att = _ref_conv_bn, _ref_up, _ref_pool, _ref_att

    def catconv(x, name):
        return cbn(cbn(x, P[name + '_0']), P[name + '_1'])

    def head(x, name):
        y = cbn(x, P[name + '_conv3'])
        return (jnp.einsum('oc,nchw->nohw', P[name + '_conv1'], y)
                + P[name + '_bias'].reshape(1, 1, 1, 1))

    d4 = catconv(jnp.concatenate([d4, cbn(pool(d3), P['conv_downsampled4'])], 1), 'conv_catd4')
    e4 = catconv(jnp.concatenate([e4, cbn(pool(e3), P['conv_downsamplee4'])], 1), 'conv_cate4')
    s4 = catconv(jnp.concatenate([s4, cbn(pool(s3), P['conv_downsamples4'])], 1), 'conv_cats4')
    s4 = s4 * e4 + s4 * att(d4, P['att_4_w'], P['att_4_b']) + s4

    d3 = catconv(jnp.concatenate([d3, cbn(up(d4), P['conv_upsampled3']),
                                  cbn(pool(d2), P['conv_downsampled3'])], 1), 'conv_catd3')
    e3 = catconv(jnp.concatenate([e3, cbn(up(e4), P['conv_upsamplee3']),
                                  cbn(pool(e2), P['conv_downsamplee3'])], 1), 'conv_cate3')
    s3 = catconv(jnp.concatenate([s3, cbn(up(s4), P['conv_upsamples3']),
                                  cbn(pool(s2), P['conv_downsamples3'])], 1), 'conv_cats3')
    s3 = s3 * e3 + s3 * att(d3, P['att_3_w'], P['att_3_b']) + s3

    d2 = catconv(jnp.concatenate([d2, cbn(up(d3), P['conv_upsampled2']),
                                  cbn(pool(d1), P['conv_downsampled2'])], 1), 'conv_catd2')
    e2 = catconv(jnp.concatenate([e2, cbn(up(e3), P['conv_upsamplee2']),
                                  cbn(pool(e1), P['conv_downsamplee2'])], 1), 'conv_cate2')
    s2 = catconv(jnp.concatenate([s2, cbn(up(s3), P['conv_upsamples2']),
                                  cbn(pool(s1), P['conv_downsamples2'])], 1), 'conv_cats2')
    s2 = s2 * e2 + s2 * att(d2, P['att_2_w'], P['att_2_b']) + s2

    d1 = catconv(jnp.concatenate([d1, cbn(up(d2), P['conv_upsampled1'])], 1), 'conv_catd1')
    e1 = catconv(jnp.concatenate([e1, cbn(up(e2), P['conv_upsamplee1'])], 1), 'conv_cate1')
    s1 = catconv(jnp.concatenate([s1, cbn(up(s2), P['conv_upsamples1'])], 1), 'conv_cats1')
    s1 = s1 * e1 + s1 * att(d1, P['att_1_w'], P['att_1_b']) + s1

    return head(s1, 'outputs'), head(e1, 'outpute')


# -----------------------------------------------------------------------------
# parameters (PyTorch inits: kaiming_normal fan_in/relu, zero biases, BN=identity)
# -----------------------------------------------------------------------------
def init_params(key, C):
    P = {}
    counter = [0]

    def nrm(shape, fan_in):
        k = jax.random.fold_in(key, counter[0])
        counter[0] += 1
        return jax.random.normal(k, shape, F32) * np.sqrt(2.0 / fan_in)

    for stream in ('s', 'd', 'e'):
        for i in (1, 2, 3):
            P[f'conv_upsample{stream}{i}'] = nrm((C, C, 3, 3), 9 * C)
        for i in (2, 3, 4):
            P[f'conv_downsample{stream}{i}'] = nrm((C, C, 3, 3), 9 * C)
        for i, m in ((1, 2), (2, 3), (3, 3), (4, 2)):
            P[f'conv_cat{stream}{i}_0'] = nrm((m * C, m * C, 3, 3), 9 * m * C)
            P[f'conv_cat{stream}{i}_1'] = nrm((C, m * C, 1, 1), m * C)
    for i in (1, 2, 3, 4):
        P[f'att_{i}_w'] = nrm((C, C), C)
        P[f'att_{i}_b'] = jnp.zeros((C,), F32)
    for name in ('outputs', 'outpute'):
        P[name + '_conv3'] = nrm((C, C, 3, 3), 9 * C)
        P[name + '_conv1'] = nrm((1, C), C)
        P[name + '_bias'] = jnp.zeros((1,), F32)
    return P


# -----------------------------------------------------------------------------
if __name__ == "__main__":
    key = jax.random.PRNGKey(0)
    N, C, H1, W1 = 2, 8, 16, 16     # channels kept a multiple of 8 for sublane-aligned slices

    P = init_params(jax.random.fold_in(key, 1), C)

    feats = {}
    idx = 100
    for lvl, (h, w) in enumerate([(H1, W1), (H1 // 2, W1 // 2),
                                  (H1 // 4, W1 // 4), (H1 // 8, W1 // 8)], start=1):
        for stream in ('s', 'd', 'e'):
            feats[f'{stream}{lvl}'] = jax.random.normal(
                jax.random.fold_in(key, idx), (N, C, h, w), F32)
            idx += 1

    s_out, e_out = multi_fusion_forward(P, feats)
    s_out, e_out = jax.block_until_ready((s_out, e_out))

    s_ref, e_ref = jax.jit(multi_fusion_forward_ref)(P, feats)
    s_ref, e_ref = jax.block_until_ready((s_ref, e_ref))

    assert s_out.shape == (N, 1, H1, W1) and e_out.shape == (N, 1, H1, W1)
    np.testing.assert_allclose(np.asarray(s_out), np.asarray(s_ref), rtol=3e-2, atol=3e-2)
    np.testing.assert_allclose(np.asarray(e_out), np.asarray(e_ref), rtol=3e-2, atol=3e-2)

    print("KERNEL_OK")
</pallas_src>

<mosaic_0001>
module attributes {stable_mosaic.version = 11 : i64} {
  func.func @kernel(%arg0: i32, %arg1: memref<16x128xf32, #tpu.memory_space<vmem>>, %arg2: memref<9x1x128xf32, #tpu.memory_space<vmem>>, %arg3: memref<128x128xf32, #tpu.memory_space<vmem>>, %arg4: memref<16x128xf32, #tpu.memory_space<vmem>>) attributes {dimension_semantics = [#tpu.dimension_semantics<arbitrary>], iteration_bounds = array<i64: 1>, scalar_prefetch = 0 : i64, scratch_operands = 0 : i64, tpu.core_type = #tpu.core_type<tc>, window_params = [{pipeline_mode = #tpu.pipeline_mode<synchronous>, transform_indices = @transform_0, window_bounds = array<i64: 16, 128>}, {pipeline_mode = #tpu.pipeline_mode<synchronous>, transform_indices = @transform_1, window_bounds = array<i64: 9, 1, 128>}, {pipeline_mode = #tpu.pipeline_mode<synchronous>, transform_indices = @transform_2, window_bounds = array<i64: 128, 128>}, {pipeline_mode = #tpu.pipeline_mode<synchronous>, transform_indices = @transform_3, window_bounds = array<i64: 16, 128>}]} {
    %c0 = arith.constant 0 : index
    %c0_0 = arith.constant 0 : index
    %0 = vector.load %arg1[%c0, %c0_0] : memref<16x128xf32, #tpu.memory_space<vmem>>, vector<16x128xf32>
    %c5_i32 = arith.constant 5 : i32
    %1 = tpu.dynamic_rotate %0 by %c5_i32 dim 1 : vector<16x128xf32>, i32 -> vector<16x128xf32>
    %c0_1 = arith.constant 0 : index
    %c0_2 = arith.constant 0 : index
    %c0_3 = arith.constant 0 : index
    %2 = vector.load %arg2[%c0_1, %c0_2, %c0_3] : memref<9x1x128xf32, #tpu.memory_space<vmem>>, vector<1x1x128xf32>
    %3 = vector.shape_cast %2 : vector<1x1x128xf32> to vector<1x128xf32>
    %4 = vector.broadcast %3 : vector<1x128xf32> to vector<16x128xf32>
    %5 = arith.mulf %1, %4 : vector<16x128xf32>
    %cst = arith.constant 1.000000e+00 : f32
    %6 = vector.broadcast %cst : f32 to vector<1x128xf32>
    %7 = arith.subf %3, %6 : vector<1x128xf32>
    %cst_4 = arith.constant 1.000000e+30 : f32
    %8 = vector.broadcast %cst_4 : f32 to vector<1x128xf32>
    %9 = arith.mulf %7, %8 : vector<1x128xf32>
    %10 = vector.broadcast %9 : vector<1x128xf32> to vector<16x128xf32>
    %11 = arith.addf %5, %10 : vector<16x128xf32>
    %c4_i32 = arith.constant 4 : i32
    %12 = tpu.dynamic_rotate %0 by %c4_i32 dim 1 : vector<16x128xf32>, i32 -> vector<16x128xf32>
    %c1 = arith.constant 1 : index
    %c0_5 = arith.constant 0 : index
    %c0_6 = arith.constant 0 : index
    %13 = vector.load %arg2[%c1, %c0_5, %c0_6] : memref<9x1x128xf32, #tpu.memory_space<vmem>>, vector<1x1x128xf32>
    %14 = vector.shape_cast %13 : vector<1x1x128xf32> to vector<1x128xf32>
    %15 = vector.broadcast %14 : vector<1x128xf32> to vector<16x128xf32>
    %16 = arith.mulf %12, %15 : vector<16x128xf32>
    %cst_7 = arith.constant 1.000000e+00 : f32
    %17 = vector.broadcast %cst_7 : f32 to vector<1x128xf32>
    %18 = arith.subf %14, %17 : vector<1x128xf32>
    %cst_8 = arith.constant 1.000000e+30 : f32
    %19 = vector.broadcast %cst_8 : f32 to vector<1x128xf32>
    %20 = arith.mulf %18, %19 : vector<1x128xf32>
    %21 = vector.broadcast %20 : vector<1x128xf32> to vector<16x128xf32>
    %22 = arith.addf %16, %21 : vector<16x128xf32>
    %23 = arith.maximumf %11, %22 : vector<16x128xf32>
    %c3_i32 = arith.constant 3 : i32
    %24 = tpu.dynamic_rotate %0 by %c3_i32 dim 1 : vector<16x128xf32>, i32 -> vector<16x128xf32>
    %c2 = arith.constant 2 : index
    %c0_9 = arith.constant 0 : index
    %c0_10 = arith.constant 0 : index
    %25 = vector.load %arg2[%c2, %c0_9, %c0_10] : memref<9x1x128xf32, #tpu.memory_space<vmem>>, vector<1x1x128xf32>
    %26 = vector.shape_cast %25 : vector<1x1x128xf32> to vector<1x128xf32>
    %27 = vector.broadcast %26 : vector<1x128xf32> to vector<16x128xf32>
    %28 = arith.mulf %24, %27 : vector<16x128xf32>
    %cst_11 = arith.constant 1.000000e+00 : f32
    %29 = vector.broadcast %cst_11 : f32 to vector<1x128xf32>
    %30 = arith.subf %26, %29 : vector<1x128xf32>
    %cst_12 = arith.constant 1.000000e+30 : f32
    %31 = vector.broadcast %cst_12 : f32 to vector<1x128xf32>
    %32 = arith.mulf %30, %31 : vector<1x128xf32>
    %33 = vector.broadcast %32 : vector<1x128xf32> to vector<16x128xf32>
    %34 = arith.addf %28, %33 : vector<16x128xf32>
    %35 = arith.maximumf %23, %34 : vector<16x128xf32>
    %c1_i32 = arith.constant 1 : i32
    %36 = tpu.dynamic_rotate %0 by %c1_i32 dim 1 : vector<16x128xf32>, i32 -> vector<16x128xf32>
    %c3 = arith.constant 3 : index
    %c0_13 = arith.constant 0 : index
    %c0_14 = arith.constant 0 : index
    %37 = vector.load %arg2[%c3, %c0_13, %c0_14] : memref<9x1x128xf32, #tpu.memory_space<vmem>>, vector<1x1x128xf32>
    %38 = vector.shape_cast %37 : vector<1x1x128xf32> to vector<1x128xf32>
    %39 = vector.broadcast %38 : vector<1x128xf32> to vector<16x128xf32>
    %40 = arith.mulf %36, %39 : vector<16x128xf32>
    %cst_15 = arith.constant 1.000000e+00 : f32
    %41 = vector.broadcast %cst_15 : f32 to vector<1x128xf32>
    %42 = arith.subf %38, %41 : vector<1x128xf32>
    %cst_16 = arith.constant 1.000000e+30 : f32
    %43 = vector.broadcast %cst_16 : f32 to vector<1x128xf32>
    %44 = arith.mulf %42, %43 : vector<1x128xf32>
    %45 = vector.broadcast %44 : vector<1x128xf32> to vector<16x128xf32>
    %46 = arith.addf %40, %45 : vector<16x128xf32>
    %47 = arith.maximumf %35, %46 : vector<16x128xf32>
    %c4 = arith.constant 4 : index
    %c0_17 = arith.constant 0 : index
    %c0_18 = arith.constant 0 : index
    %48 = vector.load %arg2[%c4, %c0_17, %c0_18] : memref<9x1x128xf32, #tpu.memory_space<vmem>>, vector<1x1x128xf32>
    %49 = vector.shape_cast %48 : vector<1x1x128xf32> to vector<1x128xf32>
    %50 = vector.broadcast %49 : vector<1x128xf32> to vector<16x128xf32>
    %51 = arith.mulf %0, %50 : vector<16x128xf32>
    %cst_19 = arith.constant 1.000000e+00 : f32
    %52 = vector.broadcast %cst_19 : f32 to vector<1x128xf32>
    %53 = arith.subf %49, %52 : vector<1x128xf32>
    %cst_20 = arith.constant 1.000000e+30 : f32
    %54 = vector.broadcast %cst_20 : f32 to vector<1x128xf32>
    %55 = arith.mulf %53, %54 : vector<1x128xf32>
    %56 = vector.broadcast %55 : vector<1x128xf32> to vector<16x128xf32>
    %57 = arith.addf %51, %56 : vector<16x128xf32>
    %58 = arith.maximumf %47, %57 : vector<16x128xf32>
    %c127_i32 = arith.constant 127 : i32
    %59 = tpu.dynamic_rotate %0 by %c127_i32 dim 1 : vector<16x128xf32>, i32 -> vector<16x128xf32>
    %c5 = arith.constant 5 : index
    %c0_21 = arith.constant 0 : index
    %c0_22 = arith.constant 0 : index
    %60 = vector.load %arg2[%c5, %c0_21, %c0_22] : memref<9x1x128xf32, #tpu.memory_space<vmem>>, vector<1x1x128xf32>
    %61 = vector.shape_cast %60 : vector<1x1x128xf32> to vector<1x128xf32>
    %62 = vector.broadcast %61 : vector<1x128xf32> to vector<16x128xf32>
    %63 = arith.mulf %59, %62 : vector<16x128xf32>
    %cst_23 = arith.constant 1.000000e+00 : f32
    %64 = vector.broadcast %cst_23 : f32 to vector<1x128xf32>
    %65 = arith.subf %61, %64 : vector<1x128xf32>
    %cst_24 = arith.constant 1.000000e+30 : f32
    %66 = vector.broadcast %cst_24 : f32 to vector<1x128xf32>
    %67 = arith.mulf %65, %66 : vector<1x128xf32>
    %68 = vector.broadcast %67 : vector<1x128xf32> to vector<16x128xf32>
    %69 = arith.addf %63, %68 : vector<16x128xf32>
    %70 = arith.maximumf %58, %69 : vector<16x128xf32>
    %c125_i32 = arith.constant 125 : i32
    %71 = tpu.dynamic_rotate %0 by %c125_i32 dim 1 : vector<16x128xf32>, i32 -> vector<16x128xf32>
    %c6 = arith.constant 6 : index
    %c0_25 = arith.constant 0 : index
    %c0_26 = arith.constant 0 : index
    %72 = vector.load %arg2[%c6, %c0_25, %c0_26] : memref<9x1x128xf32, #tpu.memory_space<vmem>>, vector<1x1x128xf32>
    %73 = vector.shape_cast %72 : vector<1x1x128xf32> to vector<1x128xf32>
    %74 = vector.broadcast %73 : vector<1x128xf32> to vector<16x128xf32>
    %75 = arith.mulf %71, %74 : vector<16x128xf32>
    %cst_27 = arith.constant 1.000000e+00 : f32
    %76 = vector.broadcast %cst_27 : f32 to vector<1x128xf32>
    %77 = arith.subf %73, %76 : vector<1x128xf32>
    %cst_28 = arith.constant 1.000000e+30 : f32
    %78 = vector.broadcast %cst_28 : f32 to vector<1x128xf32>
    %79 = arith.mulf %77, %78 : vector<1x128xf32>
    %80 = vector.broadcast %79 : vector<1x128xf32> to vector<16x128xf32>
    %81 = arith.addf %75, %80 : vector<16x128xf32>
    %82 = arith.maximumf %70, %81 : vector<16x128xf32>
    %c124_i32 = arith.constant 124 : i32
    %83 = tpu.dynamic_rotate %0 by %c124_i32 dim 1 : vector<16x128xf32>, i32 -> vector<16x128xf32>
    %c7 = arith.constant 7 : index
    %c0_29 = arith.constant 0 : index
    %c0_30 = arith.constant 0 : index
    %84 = vector.load %arg2[%c7, %c0_29, %c0_30] : memref<9x1x128xf32, #tpu.memory_space<vmem>>, vector<1x1x128xf32>
    %85 = vector.shape_cast %84 : vector<1x1x128xf32> to vector<1x128xf32>
    %86 = vector.broadcast %85 : vector<1x128xf32> to vector<16x128xf32>
    %87 = arith.mulf %83, %86 : vector<16x128xf32>
    %cst_31 = arith.constant 1.000000e+00 : f32
    %88 = vector.broadcast %cst_31 : f32 to vector<1x128xf32>
    %89 = arith.subf %85, %88 : vector<1x128xf32>
    %cst_32 = arith.constant 1.000000e+30 : f32
    %90 = vector.broadcast %cst_32 : f32 to vector<1x128xf32>
    %91 = arith.mulf %89, %90 : vector<1x128xf32>
    %92 = vector.broadcast %91 : vector<1x128xf32> to vector<16x128xf32>
    %93 = arith.addf %87, %92 : vector<16x128xf32>
    %94 = arith.maximumf %82, %93 : vector<16x128xf32>
    %c123_i32 = arith.constant 123 : i32
    %95 = tpu.dynamic_rotate %0 by %c123_i32 dim 1 : vector<16x128xf32>, i32 -> vector<16x128xf32>
    %c8 = arith.constant 8 : index
    %c0_33 = arith.constant 0 : index
    %c0_34 = arith.constant 0 : index
    %96 = vector.load %arg2[%c8, %c0_33, %c0_34] : memref<9x1x128xf32, #tpu.memory_space<vmem>>, vector<1x1x128xf32>
    %97 = vector.shape_cast %96 : vector<1x1x128xf32> to vector<1x128xf32>
    %98 = vector.broadcast %97 : vector<1x128xf32> to vector<16x128xf32>
    %99 = arith.mulf %95, %98 : vector<16x128xf32>
    %cst_35 = arith.constant 1.000000e+00 : f32
    %100 = vector.broadcast %cst_35 : f32 to vector<1x128xf32>
    %101 = arith.subf %97, %100 : vector<1x128xf32>
    %cst_36 = arith.constant 1.000000e+30 : f32
    %102 = vector.broadcast %cst_36 : f32 to vector<1x128xf32>
    %103 = arith.mulf %101, %102 : vector<1x128xf32>
    %104 = vector.broadcast %103 : vector<1x128xf32> to vector<16x128xf32>
    %105 = arith.addf %99, %104 : vector<16x128xf32>
    %106 = arith.maximumf %94, %105 : vector<16x128xf32>
    %c0_37 = arith.constant 0 : index
    %c0_38 = arith.constant 0 : index
    %107 = vector.load %arg3[%c0_37, %c0_38] : memref<128x128xf32, #tpu.memory_space<vmem>>, vector<128x128xf32>
    %cst_39 = arith.constant dense<0.000000e+00> : vector<16x128xf32>
    %108 = tpu.matmul %106, %107, %cst_39 {dimension_numbers = #tpu.dot_dimension_numbers<[1], [0], [0], [1], [0, 0, 1, 1], [], []>} : vector<16x128xf32>, vector<128x128xf32>, vector<16x128xf32> -> vector<16x128xf32>
    %c0_40 = arith.constant 0 : index
    %c0_41 = arith.constant 0 : index
    %109 = vector.load %arg4[%c0_40, %c0_41] : memref<16x128xf32, #tpu.memory_space<vmem>>, vector<16x128xf32>
    tpu.vector_store %arg4[%c0_40, %c0_41], %108 {strides = array<i32>} : memref<16x128xf32, #tpu.memory_space<vmem>>, vector<16x128xf32>,
    return
  }
  func.func @transform_0(%arg0: i32) -> (i32, i32) {
    %c0_i32 = arith.constant 0 : i32
    %c0_i32_0 = arith.constant 0 : i32
    %c0_i32_1 = arith.constant 0 : i32
    return %c0_i32, %c0_i32_0 : i32, i32
  }
  func.func @transform_1(%arg0: i32) -> (i32, i32, i32) {
    %c0_i32 = arith.constant 0 : i32
    %c0_i32_0 = arith.constant 0 : i32
    %c0_i32_1 = arith.constant 0 : i32
    %c0_i32_2 = arith.constant 0 : i32
    return %c0_i32, %c0_i32_0, %c0_i32_1 : i32, i32, i32
  }
  func.func @transform_2(%arg0: i32) -> (i32, i32) {
    %c0_i32 = arith.constant 0 : i32
    %c0_i32_0 = arith.constant 0 : i32
    %c0_i32_1 = arith.constant 0 : i32
    return %c0_i32, %c0_i32_0 : i32, i32
  }
  func.func @transform_3(%arg0: i32) -> (i32, i32) {
    %c0_i32 = arith.constant 0 : i32
    %c0_i32_0 = arith.constant 0 : i32
    %c0_i32_1 = arith.constant 0 : i32
    return %c0_i32, %c0_i32_0 : i32, i32
  }
}

</mosaic_0001>

<llo_original>
// kernel: tpu_custom_call.1
$region0: #{tpu_custom_call.1}
  #allocation0 [shape = 'u32[]', space=smem, size = 0x4, offset = 0x4, fixed_abs, tag = 'smem constant byte address 0x4 - core index']
  #allocation1 [shape = 'u32[72,128]{1,0:T(1,128)}', space=vmem, size = 0x9000, scoped, tag = 'internal scratch']
  %s0 = inlined_call_operand.hbm [shape: f32[16,128], index: 0, kind: input, shape index: {}]
  %s1 = inlined_call_operand.hbm [shape: f32[9,1,128], index: 1, kind: input, shape index: {}]
  %s2 = inlined_call_operand.hbm [shape: f32[128,128], index: 2, kind: input, shape index: {}]
  %s3 = inlined_call_operand.hbm [shape: f32[16,128], index: 3, kind: output, shape index: {}]
  %s4 = sld [smem:[#allocation0]]
  $region34: #{tpu_custom_call.1} parent=0
    _
  %s6 = ssub.s32 1, %s4
  %s7 = scalar_select 0, %s6, %s4
  $region1: #{tpu_custom_call.1} parent=0
    #allocation2 [shape = 'u8[8192]{0}', space=vmem, size = 0x2000, scoped, tag = 'input window, operand 0, single buffered']
    #allocation3 [shape = 's32[1]{0}', space=sflag, size = 0x4, scoped, tag = 'scoped memory for tpu_custom_call.1']
    #allocation4 [shape = 's32[1]{0}', space=sflag, size = 0x4, scoped, tag = 'scoped memory for tpu_custom_call.1']
    #allocation5 [shape = 'u8[4608]{0}', space=vmem, size = 0x1400, scoped, tag = 'input window, operand 1, single buffered']
    #allocation6 [shape = 's32[1]{0}', space=sflag, size = 0x4, scoped, tag = 'scoped memory for tpu_custom_call.1']
    #allocation7 [shape = 'u8[65536]{0}', space=vmem, size = 0x10000, scoped, tag = 'input window, operand 2, single buffered']
    #allocation8 [shape = 'u8[8192]{0}', space=vmem, size = 0x2000, scoped, tag = 'output window, operand 0, single buffered']
    %8 = vsyncpa [#allocation3], 0
    %9 = vsyncpa [#allocation6], 0
    %10 = vsyncpa [#allocation4], 0
    // Predicated region
    $region2: #{tpu_custom_call.1} parent=1 // pred_check
      _
    $region3: #{tpu_custom_call.1} parent=1 // pred_check_branch
      %12 = sbr.rel (0) target = $region5
    $region4: #{tpu_custom_call.1} parent=1 // pred_region
      %14 = vsyncadd [#allocation3], 0
      %s15 = sshll.u32 %s0, 4
      %s16 = int_to_ptr.hbm [resolvable:$true] %s15
      %s17 = sshll.u32 [#allocation2], 4
      %s18 = int_to_ptr.vmem [resolvable:$true] %s17
      %23 = dma.hbm_to_vmem [thread:$0]  %s16, 256, %s18, [#allocation3], 128, 128, 8
    $region5: #{tpu_custom_call.1} parent=1 // pred_fallthru
      _
    // Predicated region
    $region6: #{tpu_custom_call.1} parent=1 // pred_check
      _
    $region7: #{tpu_custom_call.1} parent=1 // pred_check_branch
      %25 = sbr.rel (0) target = $region9
    $region8: #{tpu_custom_call.1} parent=1 // pred_region
      %27 = vsyncadd [#allocation6], 0
      %s28 = sshll.u32 %s1, 4
      %s29 = int_to_ptr.hbm [resolvable:$true] %s28
      %s30 = sshll.u32 [#allocation5], 4
      %s31 = int_to_ptr.vmem [resolvable:$true] %s30
      %36 = dma.hbm_to_vmem [thread:$0]  %s29, 144, %s31, [#allocation6], 16, 16, 1
    $region9: #{tpu_custom_call.1} parent=1 // pred_fallthru
      _
    // Predicated region
    $region10: #{tpu_custom_call.1} parent=1 // pred_check
      _
    $region11: #{tpu_custom_call.1} parent=1 // pred_check_branch
      %38 = sbr.rel (0) target = $region13
    $region12: #{tpu_custom_call.1} parent=1 // pred_region
      %40 = vsyncadd [#allocation6], 0
      %s41 = sshll.u32 %s2, 4
      %s42 = int_to_ptr.hbm [resolvable:$true] %s41
      %s43 = sshll.u32 [#allocation7], 4
      %s44 = int_to_ptr.vmem [resolvable:$true] %s43
      %49 = dma.hbm_to_vmem [thread:$0]  %s42, 2048, %s44, [#allocation6], 128, 128, 8
    $region13: #{tpu_custom_call.1} parent=1 // pred_fallthru
      _
    // Predicated region
    $region14: #{tpu_custom_call.1} parent=1 // pred_check
      _
    $region15: #{tpu_custom_call.1} parent=1 // pred_check_branch
      %51 = sbr.rel (0) target = $region17
    $region16: #{tpu_custom_call.1} parent=1 // pred_region
      %53 = dma.done [#allocation3], 256
    $region17: #{tpu_custom_call.1} parent=1 // pred_fallthru
      _
    // Predicated region
    $region18: #{tpu_custom_call.1} parent=1 // pred_check
      _
    $region19: #{tpu_custom_call.1} parent=1 // pred_check_branch
      %55 = sbr.rel (0) target = $region21
    $region20: #{tpu_custom_call.1} parent=1 // pred_region
      %57 = dma.done [#allocation6], 144
    $region21: #{tpu_custom_call.1} parent=1 // pred_fallthru
      _
    // Predicated region
    $region22: #{tpu_custom_call.1} parent=1 // pred_check
      _
    $region23: #{tpu_custom_call.1} parent=1 // pred_check_branch
      %59 = sbr.rel (0) target = $region25
    $region24: #{tpu_custom_call.1} parent=1 // pred_region
      %61 = dma.done [#allocation6], 2048
    $region25: #{tpu_custom_call.1} parent=1 // pred_fallthru
      _
    %v62 = vld [vmem:[#allocation2] sm:$0xff]
    %v63 = vld [vmem:[#allocation2 + $0x8] sm:$0xff]
    %64 = vrot.lane.b32.xlu0 %v62, 5
    %v65 = vpop.permute.xlu0 %64
    %66 = vrot.lane.b32.xlu0 %v63, 5
    %v67 = vpop.permute.xlu0 %66
    %v68 = vld [vmem:[#allocation5] sm:$0x1]
    %v70 = vperm.slane %v68, 0
    %v72 = vmul.f32 %v65, %v70
    %v73 = vmul.f32 %v67, %v70
    %v74 = vsub.f32 %v68, 1.0
    %v75 = vmul.f32 %v74, 1e+30
    %v77 = vperm.slane %v75, 0
    %v79 = vadd.f32 %v72, %v77
    %v80 = vadd.f32 %v73, %v77
    %81 = vrot.lane.b32.xlu0 %v62, 4
    %v82 = vpop.permute.xlu0 %81
    %83 = vrot.lane.b32.xlu0 %v63, 4
    %v84 = vpop.permute.xlu0 %83
    %s85 = scalar_lea.vmem [#allocation5], 1
    %v86 = vld [vmem:[%s85] sm:$0x1]
    %v88 = vperm.slane %v86, 0
    %v90 = vmul.f32 %v82, %v88
    %v91 = vmul.f32 %v84, %v88
    %v92 = vsub.f32 %v86, 1.0
    %v93 = vmul.f32 %v92, 1e+30
    %v95 = vperm.slane %v93, 0
    %v97 = vadd.f32 %v90, %v95
    %v98 = vadd.f32 %v91, %v95
    %v99 = vmax.f32 %v79, %v97
    %v100 = vmax.f32 %v80, %v98
    %101 = vrot.lane.b32.xlu0 %v62, 3
    %v102 = vpop.permute.xlu0 %101
    %103 = vrot.lane.b32.xlu0 %v63, 3
    %v104 = vpop.permute.xlu0 %103
    %s105 = scalar_lea.vmem [#allocation5], 2
    %v106 = vld [vmem:[%s105] sm:$0x1]
    %v108 = vperm.slane %v106, 0
    %v110 = vmul.f32 %v102, %v108
    %v111 = vmul.f32 %v104, %v108
    %v112 = vsub.f32 %v106, 1.0
    %v113 = vmul.f32 %v112, 1e+30
    %v115 = vperm.slane %v113, 0
    %v117 = vadd.f32 %v110, %v115
    %v118 = vadd.f32 %v111, %v115
    %v119 = vmax.f32 %v99, %v117
    %v120 = vmax.f32 %v100, %v118
    %121 = vrot.lane.b32.xlu0 %v62, 1
    %v122 = vpop.permute.xlu0 %121
    %123 = vrot.lane.b32.xlu0 %v63, 1
    %v124 = vpop.permute.xlu0 %123
    %s125 = scalar_lea.vmem [#allocation5], 3
    %v126 = vld [vmem:[%s125] sm:$0x1]
    %v128 = vperm.slane %v126, 0
    %v130 = vmul.f32 %v122, %v128
    %v131 = vmul.f32 %v124, %v128
    %v132 = vsub.f32 %v126, 1.0
    %v133 = vmul.f32 %v132, 1e+30
    %v135 = vperm.slane %v133, 0
    %v137 = vadd.f32 %v130, %v135
    %v138 = vadd.f32 %v131, %v135
    %v139 = vmax.f32 %v119, %v137
    %v140 = vmax.f32 %v120, %v138
    %s141 = scalar_lea.vmem [#allocation5], 4
    %v142 = vld [vmem:[%s141] sm:$0x1]
    %v144 = vperm.slane %v142, 0
    %v146 = vmul.f32 %v62, %v144
    %v147 = vmul.f32 %v63, %v144
    %v148 = vsub.f32 %v142, 1.0
    %v149 = vmul.f32 %v148, 1e+30
    %v151 = vperm.slane %v149, 0
    %v153 = vadd.f32 %v146, %v151
    %v154 = vadd.f32 %v147, %v151
    %v155 = vmax.f32 %v139, %v153
    %v156 = vmax.f32 %v140, %v154
    %157 = vrot.lane.b32.xlu0 %v62, 127
    %v158 = vpop.permute.xlu0 %157
    %159 = vrot.lane.b32.xlu0 %v63, 127
    %v160 = vpop.permute.xlu0 %159
    %s161 = scalar_lea.vmem [#allocation5], 5
    %v162 = vld [vmem:[%s161] sm:$0x1]
    %v164 = vperm.slane %v162, 0
    %v166 = vmul.f32 %v158, %v164
    %v167 = vmul.f32 %v160, %v164
    %v168 = vsub.f32 %v162, 1.0
    %v169 = vmul.f32 %v168, 1e+30
    %v171 = vperm.slane %v169, 0
    %v173 = vadd.f32 %v166, %v171
    %v174 = vadd.f32 %v167, %v171
    %v175 = vmax.f32 %v155, %v173
    %v176 = vmax.f32 %v156, %v174
    %177 = vrot.lane.b32.xlu0 %v62, 125
    %v178 = vpop.permute.xlu0 %177
    %179 = vrot.lane.b32.xlu0 %v63, 125
    %v180 = vpop.permute.xlu0 %179
    %s181 = scalar_lea.vmem [#allocation5], 6
    %v182 = vld [vmem:[%s181] sm:$0x1]
    %v184 = vperm.slane %v182, 0
    %v186 = vmul.f32 %v178, %v184
    %v187 = vmul.f32 %v180, %v184
    %v188 = vsub.f32 %v182, 1.0
    %v189 = vmul.f32 %v188, 1e+30
    %v191 = vperm.slane %v189, 0
    %v193 = vadd.f32 %v186, %v191
    %v194 = vadd.f32 %v187, %v191
    %v195 = vmax.f32 %v175, %v193
    %v196 = vmax.f32 %v176, %v194
    %197 = vrot.lane.b32.xlu0 %v62, 124
    %v198 = vpop.permute.xlu0 %197
    %199 = vrot.lane.b32.xlu0 %v63, 124
    %v200 = vpop.permute.xlu0 %199
    %s201 = scalar_lea.vmem [#allocation5], 7
    %v202 = vld [vmem:[%s201] sm:$0x1]
    %v204 = vperm.slane %v202, 0
    %v206 = vmul.f32 %v198, %v204
    %v207 = vmul.f32 %v200, %v204
    %v208 = vsub.f32 %v202, 1.0
    %v209 = vmul.f32 %v208, 1e+30
    %v211 = vperm.slane %v209, 0
    %v213 = vadd.f32 %v206, %v211
    %v214 = vadd.f32 %v207, %v211
    %v215 = vmax.f32 %v195, %v213
    %v216 = vmax.f32 %v196, %v214
    %217 = vrot.lane.b32.xlu0 %v62, 123
    %v218 = vpop.permute.xlu0 %217
    %219 = vrot.lane.b32.xlu0 %v63, 123
    %v220 = vpop.permute.xlu0 %219
    %s221 = scalar_lea.vmem [#allocation5], 8
    %v222 = vld [vmem:[%s221] sm:$0x1]
    %v224 = vperm.slane %v222, 0
    %v226 = vmul.f32 %v218, %v224
    %v227 = vmul.f32 %v220, %v224
    %v228 = vsub.f32 %v222, 1.0
    %v229 = vmul.f32 %v228, 1e+30
    %v231 = vperm.slane %v229, 0
    %v233 = vadd.f32 %v226, %v231
    %v234 = vadd.f32 %v227, %v231
    %v235 = vmax.f32 %v215, %v233
    %v236 = vmax.f32 %v216, %v234
    %v237 = vld [vmem:[#allocation7] sm:$0xff]
    %v238 = vld [vmem:[#allocation7 + $0x8] sm:$0xff]
    %v239 = vld [vmem:[#allocation7 + $0x10] sm:$0xff]
    %v240 = vld [vmem:[#allocation7 + $0x18] sm:$0xff]
    %v241 = vld [vmem:[#allocation7 + $0x20] sm:$0xff]
    %v242 = vld [vmem:[#allocation7 + $0x28] sm:$0xff]
    %v243 = vld [vmem:[#allocation7 + $0x30] sm:$0xff]
    %v244 = vld [vmem:[#allocation7 + $0x38] sm:$0xff]
    %v245 = vld [vmem:[#allocation7 + $0x40] sm:$0xff]
    %v246 = vld [vmem:[#allocation7 + $0x48] sm:$0xff]
    %v247 = vld [vmem:[#allocation7 + $0x50] sm:$0xff]
    %v248 = vld [vmem:[#allocation7 + $0x58] sm:$0xff]
    %v249 = vld [vmem:[#allocation7 + $0x60] sm:$0xff]
    %v250 = vld [vmem:[#allocation7 + $0x68] sm:$0xff]
    %v251 = vld [vmem:[#allocation7 + $0x70] sm:$0xff]
    %v252 = vld [vmem:[#allocation7 + $0x78] sm:$0xff]
    %253 = vmatpush.msra.mxu0 %v252
    %254 = vmatpush.msra.mxu0 %v251
    %255 = vmatpush.msra.mxu0 %v250
    %256 = vmatpush.msra.mxu0 %v249
    %257 = vmatpush.msra.mxu0 %v248
    %258 = vmatpush.msra.mxu0 %v247
    %259 = vmatpush.msra.mxu0 %v246
    %260 = vmatpush.msra.mxu0 %v245
    %261 = vmatpush.msra.mxu0 %v244
    %262 = vmatpush.msra.mxu0 %v243
    %263 = vmatpush.msra.mxu0 %v242
    %264 = vmatpush.msra.mxu0 %v241
    %265 = vmatpush.msra.mxu0 %v240
    %266 = vmatpush.msra.mxu0 %v239
    %267 = vmatpush.msra.mxu0 %v238
    %268 = vmatpush.msra.mxu0 %v237
    %269 = vmatmul.f32.gmra.mxu0 %v235
    %v270 = vpop.f32.mrf.mxu0
    %v271 = vadd.f32 0.0, %v270
    %272 = vmatmul.f32.gmra.mxu0 %v236
    %v273 = vpop.f32.mrf.mxu0
    %v274 = vadd.f32 0.0, %v273
    %275 = vdwg.mxu0
    %276 = vst [vmem:[#allocation8] sm:$0xff] %v271
    %277 = vst [vmem:[#allocation8 + $0x8] sm:$0xff] %v274
    // Predicated region
    $region26: #{tpu_custom_call.1} parent=1 // pred_check
      _
    $region27: #{tpu_custom_call.1} parent=1 // pred_check_branch
      %279 = sbr.rel (0) target = $region29
    $region28: #{tpu_custom_call.1} parent=1 // pred_region
      %281 = vsyncadd [#allocation4], 0
      %s282 = sshll.u32 [#allocation8], 4
      %s283 = int_to_ptr.vmem [resolvable:$true] %s282
      %s284 = sshll.u32 %s3, 4
      %s285 = int_to_ptr.hbm [resolvable:$true] %s284
      %290 = dma.vmem_to_hbm [thread:$0]  %s283, 256, %s285, [#allocation4], 128, 128, 8
    $region29: #{tpu_custom_call.1} parent=1 // pred_fallthru
      _
    // Predicated region
    $region30: #{tpu_custom_call.1} parent=1 // pred_check
      _
    $region31: #{tpu_custom_call.1} parent=1 // pred_check_branch
      %292 = sbr.rel (0) target = $region33
    $region32: #{tpu_custom_call.1} parent=1 // pred_region
      %294 = dma.done [#allocation4], 256
    $region33: #{tpu_custom_call.1} parent=1 // pred_fallthru
      _
    %295 = vsyncpa [#allocation3], 1
    %296 = vsyncpa [#allocation6], 1
    %297 = vsyncpa [#allocation4], 1

</llo_original>
